<compile_context>
chip_gen: v7x
topology: tpu7x:2x2x1
jax: 0.10.0
libtpu: 0.0.40
codegen_flags: <defaults>
</compile_context>

<pallas_src>
import numpy as np
import jax
import jax.numpy as jnp
from jax.experimental import pallas as pl
from jax.experimental.pallas import tpu as pltpu


# ----------------------------------------------------------------------------
# Host-side density map ("sharpen") — mirrors the reference's CPU numpy path.
# TODO(synk): skimage.morphology.label / regionprops have no Pallas equivalent;
# re-implemented in plain numpy (8-connectivity flood fill) on the host.
# ----------------------------------------------------------------------------
def _label_8conn(img):
    H, W = img.shape
    labels = np.zeros((H, W), dtype=np.int32)
    cur = 0
    for si in range(H):
        for sj in range(W):
            if img[si, sj] != 0 and labels[si, sj] == 0:
                cur += 1
                labels[si, sj] = cur
                stack = [(si, sj)]
                while stack:
                    i, j = stack.pop()
                    for di in (-1, 0, 1):
                        for dj in (-1, 0, 1):
                            ni, nj = i + di, j + dj
                            if (0 <= ni < H and 0 <= nj < W
                                    and img[ni, nj] != 0 and labels[ni, nj] == 0):
                                labels[ni, nj] = cur
                                stack.append((ni, nj))
    return labels, cur


def sharpen(img):
    """Faithful numpy re-implementation of SAWLoss.sharpen."""
    t = np.zeros_like(img)
    labels, n = _label_8conn(img)
    props = []
    for lab in range(1, n + 1):
        rs, cs = np.nonzero(labels == lab)
        bbox = (int(rs.min()), int(cs.min()), int(rs.max()) + 1, int(cs.max()) + 1)
        centroid = (float(rs.mean()), float(cs.mean()))
        props.append((bbox, centroid))
    srpi = np.sqrt(2 * np.pi)
    s = 2.0
    k = 100000000000.0
    s_k = s ** (1.0 / k)
    for (bbox, _) in props:
        for i in range(bbox[0], bbox[2]):
            for j in range(bbox[1], bbox[3]):
                sum_ = 0.0
                for (_, c) in props:
                    p_i = int(c[0])
                    p_j = int(c[1])
                    sum_ += 1.0 / (srpi * s_k) * np.exp(
                        -((i - p_i) ** 2 + (j - p_j) ** 2) / (2.0 * s_k ** 2.0))
                t[i, j] = sum_
    return t / 2.50635


# ----------------------------------------------------------------------------
# Pallas kernel: per-(program, spatial-tile) elementwise + lane-partial sums.
# ----------------------------------------------------------------------------
def saw_kernel(x_ref, ydm_ref, out_ref):
    # x_ref  : (1, 4, TSR, 128)  logits [x0, x1, x2, x3]
    # ydm_ref: (1, 3, TSR, 128)  [label map, density map, valid mask]
    # out_ref: (1, 8, 128) resident lane-partial accumulators
    #   rows: 0=sum(p1*y1), 1=sum(p1), 2=sum(y1), 3=sum(mse), 4=sum(x3), 5=sum(dm)
    t = pl.program_id(1)

    @pl.when(t == 0)
    def _():
        out_ref[...] = jnp.zeros_like(out_ref)

    x0 = x_ref[0, 0]                     # (TSR, 128)
    x1 = x_ref[0, 1]
    x2 = x_ref[0, 2]
    x3 = x_ref[0, 3]
    yv = ydm_ref[0, 0]
    dm = ydm_ref[0, 1]
    msk = ydm_ref[0, 2]                  # 1 for valid pixels, 0 for lane padding

    # --- dice branch: softmax over channels {0,1} -> p1 = sigmoid(x1 - x0)
    #     (do_bg=False, 2 classes -> only class 1 contributes)
    p1 = msk / (1.0 + jnp.exp(x0 - x1))  # mask folded into the numerator
    y1 = (yv == 1.0).astype(jnp.float32)  # padded pixels are exactly 0
    tp_l = jnp.sum(p1 * y1, axis=0)      # (128,) lane partials
    sp_l = jnp.sum(p1, axis=0)           # fp = sum(p1) - tp  (wrapper)
    sy_l = jnp.sum(y1, axis=0)           # fn = sum(y1) - tp  (wrapper)

    # --- density-map branch: softmax over channels {2,3} -> q1 = sigmoid(x3-x2)
    #     q0 = 1 - q1; MSE vs dm broadcast over both softmax channels
    q1 = 1.0 / (1.0 + jnp.exp(x2 - x3))
    d1 = q1 - dm
    d0 = (1.0 - q1) - dm
    mse_l = jnp.sum((d0 * d0 + d1 * d1) * msk, axis=0)

    # --- "number of mitoses" sums (raw channel 3 of x, and dm); padding is 0
    x3_l = jnp.sum(x3, axis=0)
    dm_l = jnp.sum(dm, axis=0)

    out_ref[0, 0:1, :] += tp_l[None, :]
    out_ref[0, 1:2, :] += sp_l[None, :]
    out_ref[0, 2:3, :] += sy_l[None, :]
    out_ref[0, 3:4, :] += mse_l[None, :]
    out_ref[0, 4:5, :] += x3_l[None, :]
    out_ref[0, 5:6, :] += dm_l[None, :]


def _choose_rows(S):
    """Pad S to lane-aligned rows and pick a sublane-dense tile row count."""
    r0 = (S + 127) // 128                # rows of 128 lanes
    cap = 512                            # 512 rows x 128 lanes = 64K elem/channel tile
    if r0 <= cap:
        return r0, r0                    # single tile covers the whole image
    r = ((r0 + 63) // 64) * 64           # pad rows so a multiple-of-8 tile divides evenly
    tsr = 64
    for d in range(cap, 63, -64):        # 512, 448, ..., 64
        if r % d == 0:
            tsr = d
            break
    return r, tsr


def _saw_reduce(xr, ydmr, *, tsr, ns, nt):
    B = xr.shape[0]
    G = B * ns                           # parallel programs (batch x spatial splits)
    if ns == 1:
        in_map = lambda g, t: (g, 0, t, 0)
    else:
        in_map = lambda g, t: (g // ns, 0, (g % ns) * nt + t, 0)
    return pl.pallas_call(
        saw_kernel,
        out_shape=jax.ShapeDtypeStruct((G, 8, 128), jnp.float32),
        grid_spec=pltpu.PrefetchScalarGridSpec(
            num_scalar_prefetch=0,
            grid=(G, nt),
            in_specs=[
                pl.BlockSpec((1, 4, tsr, 128), in_map),
                pl.BlockSpec((1, 3, tsr, 128), in_map),
            ],
            out_specs=pl.BlockSpec((1, 8, 128), lambda g, t: (g, 0, 0)),
        ),
        compiler_params=pltpu.CompilerParams(
            dimension_semantics=("parallel", "arbitrary")),
    )(xr, ydmr)


def saw_loss(x, y):
    """x: (B, 4, H, W) f32 logits; y: (B, 1, H, W) f32 labels in {0, 1}."""
    B, C, H, W = x.shape
    assert C == 4

    # host-side density map, exactly like the reference's y.cpu().numpy() path
    y_np = np.asarray(y)
    dm_np = np.empty_like(y_np[:, 0:1])
    for i in range(B):
        dm_np[i, 0] = sharpen(y_np[i, 0])
    dm = jnp.asarray(dm_np)

    S = H * W
    R, tsr = _choose_rows(S)
    Sp = R * 128
    pad = Sp - S

    xf = jnp.reshape(x, (B, 4, S)).astype(jnp.float32)
    yf = jnp.reshape(y, (B, 1, S)).astype(jnp.float32)
    dmf = jnp.reshape(dm, (B, 1, S)).astype(jnp.float32)
    mskf = jnp.ones((B, 1, S), jnp.float32)
    ydmf = jnp.concatenate([yf, dmf, mskf], axis=1)       # one merged DMA stream
    if pad:
        xf = jnp.pad(xf, ((0, 0), (0, 0), (0, pad)))
        ydmf = jnp.pad(ydmf, ((0, 0), (0, 0), (0, pad)))  # mask pads to 0

    xr = xf.reshape(B, 4, R, 128)
    ydmr = ydmf.reshape(B, 3, R, 128)

    ntot = R // tsr
    # Megacore: if the batch axis alone cannot feed 2 TensorCores (v7x), split
    # the spatial reduction into 2 parallel halves, combined in the wrapper.
    if B == 1 and ntot >= 2 and ntot % 2 == 0:
        ns, nt = 2, ntot // 2
    else:
        ns, nt = 1, ntot

    out = _saw_reduce(xr, ydmr, tsr=tsr, ns=ns, nt=nt)     # (B*ns, 8, 128)
    res = out.sum(axis=-1).reshape(B, ns, 8).sum(axis=1)   # (B, 8)

    tp = res[:, 0]
    fp = res[:, 1] - tp           # sum(p1) - tp
    fn = res[:, 2] - tp           # sum(y1) - tp
    mse_sum = jnp.sum(res[:, 3])
    x3_sum = jnp.sum(res[:, 4])
    dm_sum = jnp.sum(res[:, 5])

    # SoftDiceLoss(batch_dice=False, do_bg=False, smooth=1e-5)
    smooth = 1e-5
    dc = (2.0 * tp + smooth) / (2.0 * tp + fp + fn + smooth + 1e-8)
    l_dice = -jnp.mean(dc)

    # TODO(synk): loss_density_map / loss_n_ma are undefined in the reference
    # module; using MSELoss (the only other loss built in __init__) for both.
    l_dm = mse_sum / (B * 2 * H * W)        # mean over broadcast (B,2,H,W)
    l_n = (x3_sum - dm_sum) ** 2            # MSE of two scalars

    return l_dice + l_dm + 1e-6 * l_n


if __name__ == "__main__":
    key = jax.random.PRNGKey(0)
    B, C, H, W = 2, 4, 16, 16

    x = jax.random.normal(key, (B, C, H, W), dtype=jnp.float32)

    # deterministic binary label map with a few blobs per image
    y_np = np.zeros((B, 1, H, W), dtype=np.float32)
    y_np[0, 0, 3:6, 4:7] = 1.0
    y_np[0, 0, 10:12, 10:13] = 1.0
    y_np[1, 0, 2:5, 2:5] = 1.0
    y_np[1, 0, 9:13, 8:11] = 1.0
    y = jnp.asarray(y_np)

    loss = saw_loss(x, y)
    loss = jax.block_until_ready(loss)
    assert np.isfinite(float(loss))
    print("KERNEL_OK")
</pallas_src>

<mosaic_0001>
module attributes {stable_mosaic.version = 11 : i64} {
  func.func @saw_kernel(%arg0: i32, %arg1: i32, %arg2: memref<1x4x2x128xf32, #tpu.memory_space<vmem>>, %arg3: memref<1x3x2x128xf32, #tpu.memory_space<vmem>>, %arg4: memref<1x8x128xf32, #tpu.memory_space<vmem>>) attributes {dimension_semantics = [#tpu.dimension_semantics<parallel>, #tpu.dimension_semantics<arbitrary>], iteration_bounds = array<i64: 2, 1>, scalar_prefetch = 0 : i64, scratch_operands = 0 : i64, tpu.core_type = #tpu.core_type<tc>, window_params = [{transform_indices = @transform_0, window_bounds = array<i64: 1, 4, 2, 128>}, {transform_indices = @transform_1, window_bounds = array<i64: 1, 3, 2, 128>}, {transform_indices = @transform_2, window_bounds = array<i64: 1, 8, 128>}]} {
    %c0_i32 = arith.constant 0 : i32
    %0 = arith.cmpi eq, %arg1, %c0_i32 : i32
    %1 = arith.extui %0 : i1 to i32
    %c0_i32_0 = arith.constant 0 : i32
    %2 = arith.cmpi ne, %1, %c0_i32_0 : i32
    scf.if %2 {
      %cst_69 = arith.constant 0.000000e+00 : f32
      %89 = vector.broadcast %cst_69 : f32 to vector<1x8x128xf32>
      %c0_70 = arith.constant 0 : index
      %c0_71 = arith.constant 0 : index
      %c0_72 = arith.constant 0 : index
      %90 = vector.load %arg4[%c0_70, %c0_71, %c0_72] : memref<1x8x128xf32, #tpu.memory_space<vmem>>, vector<1x8x128xf32>
      tpu.vector_store %arg4[%c0_70, %c0_71, %c0_72], %89 {strides = array<i32>} : memref<1x8x128xf32, #tpu.memory_space<vmem>>, vector<1x8x128xf32>,
    } else {
    }
    %c0 = arith.constant 0 : index
    %c0_1 = arith.constant 0 : index
    %c0_2 = arith.constant 0 : index
    %c0_3 = arith.constant 0 : index
    %3 = vector.load %arg2[%c0, %c0_1, %c0_2, %c0_3] : memref<1x4x2x128xf32, #tpu.memory_space<vmem>>, vector<1x1x2x128xf32>
    %4 = vector.shape_cast %3 : vector<1x1x2x128xf32> to vector<2x128xf32>
    %c0_4 = arith.constant 0 : index
    %c1 = arith.constant 1 : index
    %c0_5 = arith.constant 0 : index
    %c0_6 = arith.constant 0 : index
    %5 = vector.load %arg2[%c0_4, %c1, %c0_5, %c0_6] : memref<1x4x2x128xf32, #tpu.memory_space<vmem>>, vector<1x1x2x128xf32>
    %6 = vector.shape_cast %5 : vector<1x1x2x128xf32> to vector<2x128xf32>
    %c0_7 = arith.constant 0 : index
    %c2 = arith.constant 2 : index
    %c0_8 = arith.constant 0 : index
    %c0_9 = arith.constant 0 : index
    %7 = vector.load %arg2[%c0_7, %c2, %c0_8, %c0_9] : memref<1x4x2x128xf32, #tpu.memory_space<vmem>>, vector<1x1x2x128xf32>
    %8 = vector.shape_cast %7 : vector<1x1x2x128xf32> to vector<2x128xf32>
    %c0_10 = arith.constant 0 : index
    %c3 = arith.constant 3 : index
    %c0_11 = arith.constant 0 : index
    %c0_12 = arith.constant 0 : index
    %9 = vector.load %arg2[%c0_10, %c3, %c0_11, %c0_12] : memref<1x4x2x128xf32, #tpu.memory_space<vmem>>, vector<1x1x2x128xf32>
    %10 = vector.shape_cast %9 : vector<1x1x2x128xf32> to vector<2x128xf32>
    %c0_13 = arith.constant 0 : index
    %c0_14 = arith.constant 0 : index
    %c0_15 = arith.constant 0 : index
    %c0_16 = arith.constant 0 : index
    %11 = vector.load %arg3[%c0_13, %c0_14, %c0_15, %c0_16] : memref<1x3x2x128xf32, #tpu.memory_space<vmem>>, vector<1x1x2x128xf32>
    %12 = vector.shape_cast %11 : vector<1x1x2x128xf32> to vector<2x128xf32>
    %c0_17 = arith.constant 0 : index
    %c1_18 = arith.constant 1 : index
    %c0_19 = arith.constant 0 : index
    %c0_20 = arith.constant 0 : index
    %13 = vector.load %arg3[%c0_17, %c1_18, %c0_19, %c0_20] : memref<1x3x2x128xf32, #tpu.memory_space<vmem>>, vector<1x1x2x128xf32>
    %14 = vector.shape_cast %13 : vector<1x1x2x128xf32> to vector<2x128xf32>
    %c0_21 = arith.constant 0 : index
    %c2_22 = arith.constant 2 : index
    %c0_23 = arith.constant 0 : index
    %c0_24 = arith.constant 0 : index
    %15 = vector.load %arg3[%c0_21, %c2_22, %c0_23, %c0_24] : memref<1x3x2x128xf32, #tpu.memory_space<vmem>>, vector<1x1x2x128xf32>
    %16 = vector.shape_cast %15 : vector<1x1x2x128xf32> to vector<2x128xf32>
    %17 = arith.subf %4, %6 : vector<2x128xf32>
    %18 = math.exp %17 : vector<2x128xf32>
    %cst = arith.constant 1.000000e+00 : f32
    %19 = vector.broadcast %cst : f32 to vector<2x128xf32>
    %20 = arith.addf %19, %18 : vector<2x128xf32>
    %21 = arith.divf %16, %20 : vector<2x128xf32>
    %cst_25 = arith.constant 1.000000e+00 : f32
    %22 = vector.broadcast %cst_25 : f32 to vector<2x128xf32>
    %23 = arith.cmpf oeq, %12, %22 : vector<2x128xf32>
    %24 = arith.extui %23 : vector<2x128xi1> to vector<2x128xi32>
    %25 = arith.sitofp %24 : vector<2x128xi32> to vector<2x128xf32>
    %26 = arith.mulf %21, %25 : vector<2x128xf32>
    %cst_26 = arith.constant dense<0.000000e+00> : vector<128xf32>
    %27 = vector.multi_reduction <add>, %26, %cst_26 [0] : vector<2x128xf32> to vector<128xf32>
    %cst_27 = arith.constant dense<0.000000e+00> : vector<128xf32>
    %28 = vector.multi_reduction <add>, %21, %cst_27 [0] : vector<2x128xf32> to vector<128xf32>
    %cst_28 = arith.constant dense<0.000000e+00> : vector<128xf32>
    %29 = vector.multi_reduction <add>, %25, %cst_28 [0] : vector<2x128xf32> to vector<128xf32>
    %30 = arith.subf %8, %10 : vector<2x128xf32>
    %31 = math.exp %30 : vector<2x128xf32>
    %cst_29 = arith.constant 1.000000e+00 : f32
    %32 = vector.broadcast %cst_29 : f32 to vector<2x128xf32>
    %33 = arith.addf %32, %31 : vector<2x128xf32>
    %cst_30 = arith.constant 1.000000e+00 : f32
    %34 = vector.broadcast %cst_30 : f32 to vector<2x128xf32>
    %35 = arith.divf %34, %33 : vector<2x128xf32>
    %36 = arith.subf %35, %14 : vector<2x128xf32>
    %cst_31 = arith.constant 1.000000e+00 : f32
    %37 = vector.broadcast %cst_31 : f32 to vector<2x128xf32>
    %38 = arith.subf %37, %35 : vector<2x128xf32>
    %39 = arith.subf %38, %14 : vector<2x128xf32>
    %40 = arith.mulf %39, %39 : vector<2x128xf32>
    %41 = arith.mulf %36, %36 : vector<2x128xf32>
    %42 = arith.addf %40, %41 : vector<2x128xf32>
    %43 = arith.mulf %42, %16 : vector<2x128xf32>
    %cst_32 = arith.constant dense<0.000000e+00> : vector<128xf32>
    %44 = vector.multi_reduction <add>, %43, %cst_32 [0] : vector<2x128xf32> to vector<128xf32>
    %cst_33 = arith.constant dense<0.000000e+00> : vector<128xf32>
    %45 = vector.multi_reduction <add>, %10, %cst_33 [0] : vector<2x128xf32> to vector<128xf32>
    %cst_34 = arith.constant dense<0.000000e+00> : vector<128xf32>
    %46 = vector.multi_reduction <add>, %14, %cst_34 [0] : vector<2x128xf32> to vector<128xf32>
    %c0_35 = arith.constant 0 : index
    %c0_36 = arith.constant 0 : index
    %c0_37 = arith.constant 0 : index
    %47 = vector.load %arg4[%c0_35, %c0_36, %c0_37] : memref<1x8x128xf32, #tpu.memory_space<vmem>>, vector<1x1x128xf32>
    %48 = vector.shape_cast %47 : vector<1x1x128xf32> to vector<1x128xf32>
    %49 = vector.shape_cast %27 : vector<128xf32> to vector<1x128xf32>
    %50 = arith.addf %48, %49 : vector<1x128xf32>
    %c0_38 = arith.constant 0 : index
    %c0_39 = arith.constant 0 : index
    %c0_40 = arith.constant 0 : index
    %51 = vector.load %arg4[%c0_38, %c0_39, %c0_40] : memref<1x8x128xf32, #tpu.memory_space<vmem>>, vector<1x1x128xf32>
    %52 = vector.shape_cast %51 : vector<1x1x128xf32> to vector<1x128xf32>
    %53 = vector.shape_cast %50 : vector<1x128xf32> to vector<1x1x128xf32>
    tpu.vector_store %arg4[%c0_38, %c0_39, %c0_40], %53 {strides = array<i32>} : memref<1x8x128xf32, #tpu.memory_space<vmem>>, vector<1x1x128xf32>,
    %c0_41 = arith.constant 0 : index
    %c1_42 = arith.constant 1 : index
    %c0_43 = arith.constant 0 : index
    %54 = vector.load %arg4[%c0_41, %c1_42, %c0_43] : memref<1x8x128xf32, #tpu.memory_space<vmem>>, vector<1x1x128xf32>
    %55 = vector.shape_cast %54 : vector<1x1x128xf32> to vector<1x128xf32>
    %56 = vector.shape_cast %28 : vector<128xf32> to vector<1x128xf32>
    %57 = arith.addf %55, %56 : vector<1x128xf32>
    %c0_44 = arith.constant 0 : index
    %c1_45 = arith.constant 1 : index
    %c0_46 = arith.constant 0 : index
    %58 = vector.load %arg4[%c0_44, %c1_45, %c0_46] : memref<1x8x128xf32, #tpu.memory_space<vmem>>, vector<1x1x128xf32>
    %59 = vector.shape_cast %58 : vector<1x1x128xf32> to vector<1x128xf32>
    %60 = vector.shape_cast %57 : vector<1x128xf32> to vector<1x1x128xf32>
    tpu.vector_store %arg4[%c0_44, %c1_45, %c0_46], %60 {strides = array<i32>} : memref<1x8x128xf32, #tpu.memory_space<vmem>>, vector<1x1x128xf32>,
    %c0_47 = arith.constant 0 : index
    %c2_48 = arith.constant 2 : index
    %c0_49 = arith.constant 0 : index
    %61 = vector.load %arg4[%c0_47, %c2_48, %c0_49] : memref<1x8x128xf32, #tpu.memory_space<vmem>>, vector<1x1x128xf32>
    %62 = vector.shape_cast %61 : vector<1x1x128xf32> to vector<1x128xf32>
    %63 = vector.shape_cast %29 : vector<128xf32> to vector<1x128xf32>
    %64 = arith.addf %62, %63 : vector<1x128xf32>
    %c0_50 = arith.constant 0 : index
    %c2_51 = arith.constant 2 : index
    %c0_52 = arith.constant 0 : index
    %65 = vector.load %arg4[%c0_50, %c2_51, %c0_52] : memref<1x8x128xf32, #tpu.memory_space<vmem>>, vector<1x1x128xf32>
    %66 = vector.shape_cast %65 : vector<1x1x128xf32> to vector<1x128xf32>
    %67 = vector.shape_cast %64 : vector<1x128xf32> to vector<1x1x128xf32>
    tpu.vector_store %arg4[%c0_50, %c2_51, %c0_52], %67 {strides = array<i32>} : memref<1x8x128xf32, #tpu.memory_space<vmem>>, vector<1x1x128xf32>,
    %c0_53 = arith.constant 0 : index
    %c3_54 = arith.constant 3 : index
    %c0_55 = arith.constant 0 : index
    %68 = vector.load %arg4[%c0_53, %c3_54, %c0_55] : memref<1x8x128xf32, #tpu.memory_space<vmem>>, vector<1x1x128xf32>
    %69 = vector.shape_cast %68 : vector<1x1x128xf32> to vector<1x128xf32>
    %70 = vector.shape_cast %44 : vector<128xf32> to vector<1x128xf32>
    %71 = arith.addf %69, %70 : vector<1x128xf32>
    %c0_56 = arith.constant 0 : index
    %c3_57 = arith.constant 3 : index
    %c0_58 = arith.constant 0 : index
    %72 = vector.load %arg4[%c0_56, %c3_57, %c0_58] : memref<1x8x128xf32, #tpu.memory_space<vmem>>, vector<1x1x128xf32>
    %73 = vector.shape_cast %72 : vector<1x1x128xf32> to vector<1x128xf32>
    %74 = vector.shape_cast %71 : vector<1x128xf32> to vector<1x1x128xf32>
    tpu.vector_store %arg4[%c0_56, %c3_57, %c0_58], %74 {strides = array<i32>} : memref<1x8x128xf32, #tpu.memory_space<vmem>>, vector<1x1x128xf32>,
    %c0_59 = arith.constant 0 : index
    %c4 = arith.constant 4 : index
    %c0_60 = arith.constant 0 : index
    %75 = vector.load %arg4[%c0_59, %c4, %c0_60] : memref<1x8x128xf32, #tpu.memory_space<vmem>>, vector<1x1x128xf32>
    %76 = vector.shape_cast %75 : vector<1x1x128xf32> to vector<1x128xf32>
    %77 = vector.shape_cast %45 : vector<128xf32> to vector<1x128xf32>
    %78 = arith.addf %76, %77 : vector<1x128xf32>
    %c0_61 = arith.constant 0 : index
    %c4_62 = arith.constant 4 : index
    %c0_63 = arith.constant 0 : index
    %79 = vector.load %arg4[%c0_61, %c4_62, %c0_63] : memref<1x8x128xf32, #tpu.memory_space<vmem>>, vector<1x1x128xf32>
    %80 = vector.shape_cast %79 : vector<1x1x128xf32> to vector<1x128xf32>
    %81 = vector.shape_cast %78 : vector<1x128xf32> to vector<1x1x128xf32>
    tpu.vector_store %arg4[%c0_61, %c4_62, %c0_63], %81 {strides = array<i32>} : memref<1x8x128xf32, #tpu.memory_space<vmem>>, vector<1x1x128xf32>,
    %c0_64 = arith.constant 0 : index
    %c5 = arith.constant 5 : index
    %c0_65 = arith.constant 0 : index
    %82 = vector.load %arg4[%c0_64, %c5, %c0_65] : memref<1x8x128xf32, #tpu.memory_space<vmem>>, vector<1x1x128xf32>
    %83 = vector.shape_cast %82 : vector<1x1x128xf32> to vector<1x128xf32>
    %84 = vector.shape_cast %46 : vector<128xf32> to vector<1x128xf32>
    %85 = arith.addf %83, %84 : vector<1x128xf32>
    %c0_66 = arith.constant 0 : index
    %c5_67 = arith.constant 5 : index
    %c0_68 = arith.constant 0 : index
    %86 = vector.load %arg4[%c0_66, %c5_67, %c0_68] : memref<1x8x128xf32, #tpu.memory_space<vmem>>, vector<1x1x128xf32>
    %87 = vector.shape_cast %86 : vector<1x1x128xf32> to vector<1x128xf32>
    %88 = vector.shape_cast %85 : vector<1x128xf32> to vector<1x1x128xf32>
    tpu.vector_store %arg4[%c0_66, %c5_67, %c0_68], %88 {strides = array<i32>} : memref<1x8x128xf32, #tpu.memory_space<vmem>>, vector<1x1x128xf32>,
    return
  }
  func.func @transform_0(%arg0: i32, %arg1: i32) -> (i32, i32, i32, i32) {
    %c0_i32 = arith.constant 0 : i32
    %c0_i32_0 = arith.constant 0 : i32
    %c0_i32_1 = arith.constant 0 : i32
    return %arg0, %c0_i32, %arg1, %c0_i32_0 : i32, i32, i32, i32
  }
  func.func @transform_1(%arg0: i32, %arg1: i32) -> (i32, i32, i32, i32) {
    %c0_i32 = arith.constant 0 : i32
    %c0_i32_0 = arith.constant 0 : i32
    %c0_i32_1 = arith.constant 0 : i32
    return %arg0, %c0_i32, %arg1, %c0_i32_0 : i32, i32, i32, i32
  }
  func.func @transform_2(%arg0: i32, %arg1: i32) -> (i32, i32, i32) {
    %c0_i32 = arith.constant 0 : i32
    %c0_i32_0 = arith.constant 0 : i32
    %c0_i32_1 = arith.constant 0 : i32
    return %arg0, %c0_i32, %c0_i32_0 : i32, i32, i32
  }
}

</mosaic_0001>

<llo_original>
// kernel: tpu_custom_call.1
$region0: #{tpu_custom_call.1}
  #allocation0 [shape = 'u32[]', space=smem, size = 0x4, offset = 0x4, fixed_abs, tag = 'smem constant byte address 0x4 - core index']
  #allocation1 [shape = 'u32[144,128]{1,0:T(1,128)}', space=vmem, size = 0x12000, scoped, tag = 'internal scratch']
  %s0 = inlined_call_operand.hbm [shape: f32[2,4,2,128], index: 0, kind: input, shape index: {}]
  %s1 = inlined_call_operand.hbm [shape: f32[2,3,2,128], index: 1, kind: input, shape index: {}]
  %s2 = inlined_call_operand.hbm [shape: f32[2,8,128], index: 2, kind: output, shape index: {}]
  %s3 = sld [smem:[#allocation0]]
  $region53: #{tpu_custom_call.1} parent=0
    _
  %s5 = ssub.s32 1, %s3
  %s6 = scalar_select 0, %s5, %s3
  $region1: #{tpu_custom_call.1} parent=0
    #allocation2 [shape = 'u8[8192]{0}', space=vmem, size = 0x2000, scoped, tag = 'input window, operand 0']
    #allocation3 [shape = 's32[2]{0}', space=sflag, size = 0x8, scoped, tag = 'scoped memory for tpu_custom_call.1']
    #allocation4 [shape = 's32[2]{0}', space=sflag, size = 0x8, scoped, tag = 'scoped memory for tpu_custom_call.1']
    #allocation5 [shape = 'u8[6144]{0}', space=vmem, size = 0x1800, scoped, tag = 'input window, operand 1']
    #allocation6 [shape = 's32[2]{0}', space=sflag, size = 0x8, scoped, tag = 'scoped memory for tpu_custom_call.1']
    #allocation7 [shape = 'u8[8192]{0}', space=vmem, size = 0x2000, scoped, tag = 'output window, operand 0']
    %7 = vsyncpa [#allocation3], 0
    %s8 = scalar_lea.sflag [#allocation3], 1
    %9 = vsyncpa %s8, 0
    %10 = vsyncpa [#allocation6], 0
    %s11 = scalar_lea.sflag [#allocation6], 1
    %12 = vsyncpa %s11, 0
    %13 = vsyncpa [#allocation4], 0
    %s14 = scalar_lea.sflag [#allocation4], 1
    %15 = vsyncpa %s14, 0
    loop: start=0, step=1, limit=4
    $region2: #{tpu_custom_call.1} parent=1 // loop_pre_header
      _
    $region3: #{tpu_custom_call.1} parent=1 // loop_header
      %s17 = sphi 0, %s21
      %p18 = scmp.ge.s32.totalorder %s17, 4
      %s24 = sphi 0, %s36
      %s25 = sphi 0, %s32
      %s26 = sphi 0, %s24
      %s27 = sphi 0, %s25
      %s28 = sphi 0, %s26
      %s29 = sphi 0, %s27
      %s41 = sphi 0, %s43
      %s44 = sphi 0, %s41
      %s45 = sphi 0, %s44
      %s61 = sphi 0, %s45
      %s69 = sphi 0, %s71
      %s72 = sphi 0, %s69
      %s73 = sphi 0, %s72
      %s89 = sphi 0, %s73
      %s95 = sphi 0, %s97
      %s98 = sphi 0, %s95
      %s99 = sphi 0, %s98
      %s115 = sphi 0, %s99
    $region4: #{tpu_custom_call.1} parent=1 // loop_header_branch
      %20 = sbr.rel (%p18) target = $region8
    $region5: #{tpu_custom_call.1} parent=1 // loop_body
      %s22 = ssub.s32 %s17, 1
      %s23 = ssub.s32 %s17, 2
      %s30 = sadd.s32 1, %s25
      %p31 = scmp.ge.s32.totalorder %s30, 1
      %s32 = scalar_select %p31, 0, %s30
      %s33 = sadd.s32 1, %s24
      %s34 = scalar_select %p31, %s33, %s24
      %p35 = scmp.ge.s32.totalorder %s34, 2
      %s36 = scalar_select %p35, 0, %s34
      %s37 = ssub.s32 %s24, %s36
      %s38 = ssub.s32 %s25, %s32
      %s39 = sor.u32 %s37, %s38
      %p40 = scmp.eq.s32.totalorder %s39, 0
      %s42 = sadd.s32 %s41, 1
      %s43 = scalar_select %p40, %s41, %s42
      %p46 = pneg %p40
      %p47 = scmp.eq.s32.totalorder %s17, 1
      %p48 = por %p46, %p47
      %p49 = scmp.ne.s32.totalorder %s41, %s44
      %p50 = scmp.eq.s32.totalorder %s17, 0
      %p51 = por %p49, %p50
      %p52 = scmp.ne.s32.totalorder %s41, %s44
      %p53 = scmp.eq.s32.totalorder %s22, 1
      %p54 = por %p52, %p53
      %p55 = scmp.ne.s32.totalorder %s44, %s45
      %p56 = scmp.eq.s32.totalorder %s22, 0
      %p57 = por %p55, %p56
      %p58 = scmp.ne.s32.totalorder %s44, %s45
      %p59 = scmp.eq.s32.totalorder %s23, 1
      %p60 = por %p58, %p59
      %p62 = scmp.ne.s32.totalorder %s45, %s61
      %p63 = scmp.eq.s32.totalorder %s23, 0
      %p64 = por %p62, %p63
      %s65 = ssub.s32 %s24, %s36
      %s66 = ssub.s32 %s25, %s32
      %s67 = sor.u32 %s65, %s66
      %p68 = scmp.eq.s32.totalorder %s67, 0
      %s70 = sadd.s32 %s69, 1
      %s71 = scalar_select %p68, %s69, %s70
      %p74 = pneg %p68
      %p75 = scmp.eq.s32.totalorder %s17, 1
      %p76 = por %p74, %p75
      %p77 = scmp.ne.s32.totalorder %s69, %s72
      %p78 = scmp.eq.s32.totalorder %s17, 0
      %p79 = por %p77, %p78
      %p80 = scmp.ne.s32.totalorder %s69, %s72
      %p81 = scmp.eq.s32.totalorder %s22, 1
      %p82 = por %p80, %p81
      %p83 = scmp.ne.s32.totalorder %s72, %s73
      %p84 = scmp.eq.s32.totalorder %s22, 0
      %p85 = por %p83, %p84
      %p86 = scmp.ne.s32.totalorder %s72, %s73
      %p87 = scmp.eq.s32.totalorder %s23, 1
      %p88 = por %p86, %p87
      %p90 = scmp.ne.s32.totalorder %s73, %s89
      %p91 = scmp.eq.s32.totalorder %s23, 0
      %p92 = por %p90, %p91
      %s93 = ssub.s32 %s24, %s36
      %p94 = scmp.eq.s32.totalorder %s93, 0
      %s96 = sadd.s32 %s95, 1
      %s97 = scalar_select %p94, %s95, %s96
      %p100 = pneg %p94
      %p101 = scmp.eq.s32.totalorder %s17, 1
      %p102 = por %p100, %p101
      %p103 = scmp.ne.s32.totalorder %s95, %s98
      %p104 = scmp.eq.s32.totalorder %s17, 0
      %p105 = por %p103, %p104
      %p106 = scmp.ne.s32.totalorder %s95, %s98
      %p107 = scmp.eq.s32.totalorder %s22, 1
      %p108 = por %p106, %p107
      %p109 = scmp.ne.s32.totalorder %s98, %s99
      %p110 = scmp.eq.s32.totalorder %s22, 0
      %p111 = por %p109, %p110
      %p112 = scmp.ne.s32.totalorder %s98, %s99
      %p113 = scmp.eq.s32.totalorder %s23, 1
      %p114 = por %p112, %p113
      %p116 = scmp.ne.s32.totalorder %s99, %s115
      %p117 = scmp.eq.s32.totalorder %s23, 0
      %p118 = por %p116, %p117
      %p119 = scmp.le.s32.totalorder 1, %s17
      %p120 = scmp.lt.s32.totalorder %s17, 3
      %p121 = pnand %p119, %p120
      %p122 = pneg %p121
      // Predicated region
      $region9: #{tpu_custom_call.1} parent=5 // pred_check
        _
      $region10: #{tpu_custom_call.1} parent=5 // pred_check_branch
        %124 = sbr.rel (%p121) target = $region12
      $region11: #{tpu_custom_call.1} parent=5 // pred_region
        %s125 = ssub.s32 %s17, 1
      $region12: #{tpu_custom_call.1} parent=5 // pred_fallthru
        _
      %p126 = scmp.lt.s32.totalorder %s17, 2
      // Predicated region
      $region13: #{tpu_custom_call.1} parent=5 // pred_check
        %p127 = pneg %p126
      $region14: #{tpu_custom_call.1} parent=5 // pred_check_branch
        %129 = sbr.rel (%p127) target = $region16
      $region15: #{tpu_custom_call.1} parent=5 // pred_region
        // Predicated region
        $region17: #{tpu_custom_call.1} parent=15 // pred_check
          %p130 = pneg %p51
        $region18: #{tpu_custom_call.1} parent=15 // pred_check_branch
          %132 = sbr.rel (%p130) target = $region20
        $region19: #{tpu_custom_call.1} parent=15 // pred_region
          %s133 = sand.u32 %s41, 1
          %s134 = scalar_lea.sflag [#allocation3], %s133
          %s135 = sand.u32 %s41, 1
          %s136 = smul.addr %s135, 8
          %s137 = scalar_lea.vmem [#allocation2], %s136
          %s139 = ssub.s32 128, 128
          %140 = vsyncadd %s134, %s139
          %s141 = smul.addr %s24, 4
          %s142 = sadd.s32 %s25, %s141
          %s143 = smul.addr %s142, 32
          %s144 = scalar_lea.hbm %s0, %s143
          %s145 = sshll.u32 %s137, 4
          %s146 = int_to_ptr.vmem [resolvable:$true] %s145
          %151 = dma.hbm_to_vmem [thread:$0]  %s144, 128, %s146, %s134, 32, 32, 2
        $region20: #{tpu_custom_call.1} parent=15 // pred_fallthru
          _
        // Predicated region
        $region21: #{tpu_custom_call.1} parent=15 // pred_check
          %p152 = pneg %p79
        $region22: #{tpu_custom_call.1} parent=15 // pred_check_branch
          %154 = sbr.rel (%p152) target = $region24
        $region23: #{tpu_custom_call.1} parent=15 // pred_region
          %s155 = sand.u32 %s69, 1
          %s156 = scalar_lea.sflag [#allocation6], %s155
          %s157 = sand.u32 %s69, 1
          %s158 = smul.addr %s157, 6
          %s159 = scalar_lea.vmem [#allocation5], %s158
          %s161 = ssub.s32 96, 96
          %162 = vsyncadd %s156, %s161
          %s163 = smul.addr %s24, 3
          %s164 = sadd.s32 %s25, %s163
          %s165 = smul.addr %s164, 32
          %s166 = scalar_lea.hbm %s1, %s165
          %s167 = sshll.u32 %s159, 4
          %s168 = int_to_ptr.vmem [resolvable:$true] %s167
          %173 = dma.hbm_to_vmem [thread:$0]  %s166, 96, %s168, %s156, 32, 32, 2
        $region24: #{tpu_custom_call.1} parent=15 // pred_fallthru
          _
      $region16: #{tpu_custom_call.1} parent=5 // pred_fallthru
        _
      %p174 = scmp.le.s32.totalorder 1, %s17
      %p175 = scmp.lt.s32.totalorder %s17, 3
      %p176 = pnand %p174, %p175
      %p177 = pneg %p176
      // Predicated region
      $region25: #{tpu_custom_call.1} parent=5 // pred_check
        _
      $region26: #{tpu_custom_call.1} parent=5 // pred_check_branch
        %179 = sbr.rel (%p176) target = $region28
      $region27: #{tpu_custom_call.1} parent=5 // pred_region
        %s180 = ssub.s32 %s17, 1
        %s181 = sand.u32 %s44, 1
        %s182 = scalar_lea.sflag [#allocation3], %s181
        %s183 = sand.u32 %s44, 1
        %s184 = smul.addr %s183, 8
        %s185 = scalar_lea.vmem [#allocation2], %s184
        // Predicated region
        $region29: #{tpu_custom_call.1} parent=27 // pred_check
          %p186 = pneg %p57
        $region30: #{tpu_custom_call.1} parent=27 // pred_check_branch
          %188 = sbr.rel (%p186) target = $region32
        $region31: #{tpu_custom_call.1} parent=27 // pred_region
          %189 = dma.done %s182, 128
        $region32: #{tpu_custom_call.1} parent=27 // pred_fallthru
          _
        %s190 = sand.u32 %s72, 1
        %s191 = scalar_lea.sflag [#allocation6], %s190
        %s192 = sand.u32 %s72, 1
        %s193 = smul.addr %s192, 6
        %s194 = scalar_lea.vmem [#allocation5], %s193
        // Predicated region
        $region33: #{tpu_custom_call.1} parent=27 // pred_check
          %p195 = pneg %p85
        $region34: #{tpu_custom_call.1} parent=27 // pred_check_branch
          %197 = sbr.rel (%p195) target = $region36
        $region35: #{tpu_custom_call.1} parent=27 // pred_region
          %198 = dma.done %s191, 96
        $region36: #{tpu_custom_call.1} parent=27 // pred_fallthru
          _
        %s199 = sand.u32 %s44, 1
        %s200 = scalar_lea.sflag [#allocation3], %s199
        %s201 = sand.u32 %s44, 1
        %s202 = smul.addr %s201, 8
        %s203 = scalar_lea.vmem [#allocation2], %s202
        %p204 = pneg %p57
        %p205 = pneg %p54
        %s206 = sand.u32 %s72, 1
        %s207 = scalar_lea.sflag [#allocation6], %s206
        %s208 = sand.u32 %s72, 1
        %s209 = smul.addr %s208, 6
        %s210 = scalar_lea.vmem [#allocation5], %s209
        %p211 = pneg %p85
        %p212 = pneg %p82
        %p213 = pneg %p111
        %p214 = pneg %p108
        %s215 = sand.u32 %s98, 1
        %s216 = scalar_lea.sflag [#allocation4], %s215
        %s217 = sand.u32 %s98, 1
        %s218 = smul.addr %s217, 8
        %s219 = scalar_lea.vmem [#allocation7], %s218
        %p220 = scmp.eq.s32.totalorder %s27, 0
        // Predicated region
        $region37: #{tpu_custom_call.1} parent=27 // pred_check
          %p221 = pneg %p220
        $region38: #{tpu_custom_call.1} parent=27 // pred_check_branch
          %223 = sbr.rel (%p221) target = $region40
        $region39: #{tpu_custom_call.1} parent=27 // pred_region
          %224 = vst [vmem:[%s219] sm:$0xff] 0.0
        $region40: #{tpu_custom_call.1} parent=27 // pred_fallthru
          _
        %v225 = vld [vmem:[%s185] sm:$0x3]
        %s226 = scalar_lea.vmem %s185, 2 [#allocation2]
        %v227 = vld [vmem:[%s226] sm:$0x3]
        %s228 = scalar_lea.vmem %s185, 4 [#allocation2]
        %v229 = vld [vmem:[%s228] sm:$0x3]
        %s230 = scalar_lea.vmem %s185, 6 [#allocation2]
        %v231 = vld [vmem:[%s230] sm:$0x3]
        %v232 = vld [vmem:[%s194] sm:$0x3]
        %s233 = scalar_lea.vmem %s194, 2 [#allocation5]
        %v234 = vld [vmem:[%s233] sm:$0x3]
        %s235 = scalar_lea.vmem %s194, 4 [#allocation5]
        %v236 = vld [vmem:[%s235] sm:$0x3]
        %v237 = vsub.f32 %v225, %v227
        %v238 = vmul.f32 %v237, 1.442695
        %v239 = vpow.pop %v238
        %v240 = vadd.f32 %v239, 1.0
        %v241 = vrcp.pop %v240
        %v242 = vmul.f32 %v236, %v241
        %vm243 = vcmp.eq.f32.partialorder %v232, 1.0
        %v244 = vsel %vm243, 1, 0
        %v245 = vcvt.s32.f32 %v244
        %v246 = vmul.f32 %v242, %v245
        %vm247 = vcmask 1041408
        %v248 = vsel %vm247, %v246, 0.0
        %v249 = vrot.slane %v248, 4
        %v250 = vadd.f32 %v248, %v249
        %v251 = vrot.slane %v250, 2
        %v252 = vadd.f32 %v250, %v251
        %v253 = vrot.slane %v252, 1
        %v254 = vadd.f32 %v252, %v253
        %v255 = vsel %vm247, %v242, 0.0
        %v256 = vrot.slane %v255, 4
        %v257 = vadd.f32 %v255, %v256
        %v258 = vrot.slane %v257, 2
        %v259 = vadd.f32 %v257, %v258
        %v260 = vrot.slane %v259, 1
        %v261 = vadd.f32 %v259, %v260
        %v262 = vsel %vm247, %v245, 0.0
        %v263 = vrot.slane %v262, 4
        %v264 = vadd.f32 %v262, %v263
        %v265 = vrot.slane %v264, 2
        %v266 = vadd.f32 %v264, %v265
        %v267 = vrot.slane %v266, 1
        %v268 = vadd.f32 %v266, %v267
        %v269 = vsub.f32 %v229, %v231
        %v270 = vmul.f32 %v269, 1.442695
        %v271 = vpow.pop %v270
        %v272 = vadd.f32 %v271, 1.0
        %v273 = vrcp.pop %v272
        %v274 = vmul.f32 1.0, %v273
        %v275 = vsub.f32 %v274, %v234
        %v276 = vsub.f32 1.0, %v274
        %v277 = vsub.f32 %v276, %v234
        %v278 = vmul.f32 %v277, %v277
        %v279 = vmul.f32 %v275, %v275
        %v280 = vadd.f32 %v278, %v279
        %v281 = vmul.f32 %v280, %v236
        %v282 = vsel %vm247, %v281, 0.0
        %v283 = vrot.slane %v282, 4
        %v284 = vadd.f32 %v282, %v283
        %v285 = vrot.slane %v284, 2
        %v286 = vadd.f32 %v284, %v285
        %v287 = vrot.slane %v286, 1
        %v288 = vadd.f32 %v286, %v287
        %v289 = vsel %vm247, %v231, 0.0
        %v290 = vrot.slane %v289, 4
        %v291 = vadd.f32 %v289, %v290
        %v292 = vrot.slane %v291, 2
        %v293 = vadd.f32 %v291, %v292
        %v294 = vrot.slane %v293, 1
        %v295 = vadd.f32 %v293, %v294
        %v296 = vsel %vm247, %v234, 0.0
        %v297 = vrot.slane %v296, 4
        %v298 = vadd.f32 %v296, %v297
        %v299 = vrot.slane %v298, 2
        %v300 = vadd.f32 %v298, %v299
        %v301 = vrot.slane %v300, 1
        %v302 = vadd.f32 %v300, %v301
        %v303 = vld [vmem:[%s219] sm:$0x1]
        %v304 = vadd.f32 %v303, %v254
        %305 = vst [vmem:[%s219] sm:$0x1] %v304
        %v306 = vld [vmem:[%s219 + $0x1] sm:$0x1]
        %v307 = vadd.f32 %v306, %v261
        %308 = vst [vmem:[%s219 + $0x1] sm:$0x1] %v307
        %v309 = vld [vmem:[%s219 + $0x2] sm:$0x1]
        %v310 = vadd.f32 %v309, %v268
        %311 = vst [vmem:[%s219 + $0x2] sm:$0x1] %v310
        %v312 = vld [vmem:[%s219 + $0x3] sm:$0x1]
        %v313 = vadd.f32 %v312, %v288
        %314 = vst [vmem:[%s219 + $0x3] sm:$0x1] %v313
        %v315 = vld [vmem:[%s219 + $0x4] sm:$0x1]
        %v316 = vadd.f32 %v315, %v295
        %317 = vst [vmem:[%s219 + $0x4] sm:$0x1] %v316
        %v318 = vld [vmem:[%s219 + $0x5] sm:$0x1]
        %v319 = vadd.f32 %v318, %v302
        %320 = vst [vmem:[%s219 + $0x5] sm:$0x1] %v319
        %s321 = sand.u32 %s98, 1
        %s322 = scalar_lea.sflag [#allocation4], %s321
        %s323 = sand.u32 %s98, 1
        %s324 = smul.addr %s323, 8
        %s325 = scalar_lea.vmem [#allocation7], %s324
        // Predicated region
        $region41: #{tpu_custom_call.1} parent=27 // pred_check
          %p326 = pneg %p108
        $region42: #{tpu_custom_call.1} parent=27 // pred_check_branch
          %328 = sbr.rel (%p326) target = $region44
        $region43: #{tpu_custom_call.1} parent=27 // pred_region
          %s330 = ssub.s32 128, 128
          %331 = vsyncadd %s322, %s330
          %s332 = smul.addr %s26, 128
          %s333 = scalar_lea.hbm %s2, %s332
          %s335 = sshll.u32 %s325, 4
          %s336 = int_to_ptr.vmem [resolvable:$true] %s335
          %338 = dma.vmem_to_hbm [thread:$0]  %s336, 128, %s333, %s322
        $region44: #{tpu_custom_call.1} parent=27 // pred_fallthru
          _
      $region28: #{tpu_custom_call.1} parent=5 // pred_fallthru
        _
      %p339 = scmp.le.s32.totalorder 2, %s17
      // Predicated region
      $region45: #{tpu_custom_call.1} parent=5 // pred_check
        %p340 = pneg %p339
      $region46: #{tpu_custom_call.1} parent=5 // pred_check_branch
        %342 = sbr.rel (%p340) target = $region48
      $region47: #{tpu_custom_call.1} parent=5 // pred_region
        %s343 = ssub.s32 %s17, 2
        // Predicated region
        $region49: #{tpu_custom_call.1} parent=47 // pred_check
          %p344 = pneg %p114
        $region50: #{tpu_custom_call.1} parent=47 // pred_check_branch
          %346 = sbr.rel (%p344) target = $region52
        $region51: #{tpu_custom_call.1} parent=47 // pred_region
          %s347 = sand.u32 %s99, 1
          %s348 = scalar_lea.sflag [#allocation4], %s347
          %s349 = sand.u32 %s99, 1
          %s350 = smul.addr %s349, 8
          %s351 = scalar_lea.vmem [#allocation7], %s350
          %352 = dma.done %s348, 128
        $region52: #{tpu_custom_call.1} parent=47 // pred_fallthru
          _
      $region48: #{tpu_custom_call.1} parent=5 // pred_fallthru
        _
    $region6: #{tpu_custom_call.1} parent=1 // loop_footer
      %s21 = sadd.s32 1, %s17
    $region7: #{tpu_custom_call.1} parent=1 // loop_footer_branch
      %16 = sbr.rel target = $region3
    $region8: #{tpu_custom_call.1} parent=1 // loop_exit
      _
    %353 = vsyncpa [#allocation3], 1
    %s354 = scalar_lea.sflag [#allocation3], 1
    %355 = vsyncpa %s354, 1
    %356 = vsyncpa [#allocation6], 1
    %s357 = scalar_lea.sflag [#allocation6], 1
    %358 = vsyncpa %s357, 1
    %359 = vsyncpa [#allocation4], 1
    %s360 = scalar_lea.sflag [#allocation4], 1
    %361 = vsyncpa %s360, 1

</llo_original>
